<compile_context>
chip_gen: v7x
topology: tpu7x:2x2x1
jax: 0.10.0
libtpu: 0.0.40
codegen_flags: <defaults>
</compile_context>

<pallas_src>
import jax
import jax.numpy as jnp
from jax.experimental import pallas as pl
from jax.experimental.pallas import tpu as pltpu

_SUBLANE = 8          # sublane granularity for the batch tile
_TB_CAP = 2048        # batch-tile cap (per perf review)


def _round_up(n: int, m: int) -> int:
    return ((n + m - 1) // m) * m


def _choose_batch_tile(batch: int, cap: int = _TB_CAP) -> int:
    """Largest batch tile (multiple of 8, <= cap) keeping padding waste <= ~12.5%."""
    b8 = _round_up(batch, _SUBLANE)
    if b8 <= cap:
        return b8                      # single tile, zero extra padding
    tb = cap
    while tb > _SUBLANE:
        waste = _round_up(b8, tb) - b8
        if waste * 8 <= b8:            # <= 12.5% padded rows
            return tb
        tb //= 2
    return _SUBLANE


def _mlp_kernel(x_ref, w1_ref, b1_ref, w2_ref, b2_ref, w3_ref, b3_ref, out_ref):
    w_dtype = w1_ref.dtype  # bf16 (or f32) MXU operand dtype

    # Layer 1: Linear + ReLU   (Dropout = identity at inference)
    h = jnp.dot(x_ref[...], w1_ref[...], preferred_element_type=jnp.float32)
    h = jnp.maximum(h + b1_ref[...], 0.0)                 # (TB, H) + (1, H) broadcast, f32

    # Layer 2: Linear + ReLU   (Dropout = identity at inference)
    h = jnp.dot(h.astype(w_dtype), w2_ref[...], preferred_element_type=jnp.float32)
    h = jnp.maximum(h + b2_ref[...], 0.0)

    # Layer 3: Linear + Sigmoid (exp rides the EUP slot; (TB, O) store)
    h = jnp.dot(h.astype(w_dtype), w3_ref[...], preferred_element_type=jnp.float32)
    out_ref[...] = jax.nn.sigmoid(h + b3_ref[...]).astype(out_ref.dtype)


def binary_classifier_forward(x, w1, b1, w2, b2, w3, b3, *, compute_dtype=jnp.bfloat16):
    """Eval-mode forward pass of BinaryClassifier.

    x:  (B, F) float32
    wK: (in, out) float32  (transposed vs PyTorch's nn.Linear storage)
    bK: (1, out) float32
    returns (B, output_dim) float32
    """
    B, F = x.shape
    H = w1.shape[1]
    O = w3.shape[1]
    # Guard against raw PyTorch (out, in) weights being passed by mistake.
    assert w1.shape == (F, H), f"w1 expected (in, out)=({F},{H}), got {w1.shape}"
    assert w2.shape == (H, H), f"w2 expected ({H},{H}), got {w2.shape}"
    assert w3.shape == (H, O), f"w3 expected ({H},{O}), got {w3.shape}"
    assert b1.shape == (1, H) and b2.shape == (1, H) and b3.shape == (1, O), \
        "biases must be shaped (1, out)"

    # --- batch tiling (only dimension that is padded) -----------------------------------
    TB = _choose_batch_tile(B)
    Bp = _round_up(B, TB)
    n_tiles = Bp // TB

    # --- dtype handling: bf16 MXU operands, f32 biases / epilogue -----------------------
    x_c = x.astype(compute_dtype)
    w1_c, w2_c, w3_c = (w.astype(compute_dtype) for w in (w1, w2, w3))
    b1_c, b2_c, b3_c = (b.astype(jnp.float32) for b in (b1, b2, b3))

    if Bp != B:
        x_c = jnp.pad(x_c, ((0, Bp - B), (0, 0)))          # row padding only

    # --- BlockSpecs: x / out stream per batch tile; weights & biases VMEM-resident ------
    resident = lambda shape: pl.BlockSpec(shape, lambda i: (0, 0))

    x_it = jnp.dtype(compute_dtype).itemsize
    weight_bytes = (F * H + H * H + H * O) * x_it + (2 * H + O) * 4
    need_vmem = (2 * TB * F * x_it          # x tile, double-buffered
                 + 2 * TB * O * 4           # out tile, double-buffered
                 + 2 * weight_bytes         # resident operands (assume 2 buffers)
                 + (2 << 20))               # headroom for compiler scratch
    vmem_limit = min(64 << 20, max(need_vmem, 16 << 20))

    # Advisory cost from the TRUE (unpadded) problem size.
    cost = pl.CostEstimate(
        flops=2 * B * (F * H + H * H + H * O),
        transcendentals=B * O,
        bytes_accessed=(B * F * x_it + B * O * 4 + weight_bytes),
    )

    out_padded = pl.pallas_call(
        _mlp_kernel,
        out_shape=jax.ShapeDtypeStruct((Bp, O), jnp.float32),
        grid_spec=pltpu.PrefetchScalarGridSpec(
            num_scalar_prefetch=0,
            grid=(n_tiles,),
            in_specs=[
                pl.BlockSpec((TB, F), lambda i: (i, 0)),    # x streams per batch tile
                resident((F, H)), resident((1, H)),
                resident((H, H)), resident((1, H)),
                resident((H, O)), resident((1, O)),
            ],
            out_specs=pl.BlockSpec((TB, O), lambda i: (i, 0)),
        ),
        compiler_params=pltpu.CompilerParams(
            dimension_semantics=(pltpu.PARALLEL,),
            vmem_limit_bytes=vmem_limit,
        ),
        cost_estimate=cost,
    )(x_c, w1_c, b1_c, w2_c, b2_c, w3_c, b3_c)

    # Drop padded batch rows (padded rows contain sigmoid(bias-only path) garbage).
    return out_padded if Bp == B else out_padded[:B]


def init_params(key, input_features, hidden_dim, output_dim):
    """Deterministic init mirroring nn.Linear's U(-1/sqrt(fan_in), 1/sqrt(fan_in)).
    Weights returned already transposed to (in, out); biases shaped (1, out)."""
    ks = jax.random.split(key, 6)

    def linear(kw, kb, fan_in, fan_out):
        bound = 1.0 / jnp.sqrt(fan_in)
        w = jax.random.uniform(kw, (fan_in, fan_out), jnp.float32, -bound, bound)
        b = jax.random.uniform(kb, (1, fan_out), jnp.float32, -bound, bound)
        return w, b

    w1, b1 = linear(ks[0], ks[1], input_features, hidden_dim)
    w2, b2 = linear(ks[2], ks[3], hidden_dim, hidden_dim)
    w3, b3 = linear(ks[4], ks[5], hidden_dim, output_dim)
    return w1, b1, w2, b2, w3, b3


def _reference(x, params):
    w1, b1, w2, b2, w3, b3 = params
    h = jnp.maximum(x @ w1 + b1, 0.0)
    h = jnp.maximum(h @ w2 + b2, 0.0)
    return jax.nn.sigmoid(h @ w3 + b3)


if __name__ == "__main__":
    input_features = 32
    hidden_dim = 32
    output_dim = 1

    key = jax.random.PRNGKey(0)
    kx, kx2, kp = jax.random.split(key, 3)
    params = init_params(kp, input_features, hidden_dim, output_dim)

    # Check 1: batch exactly a multiple of 8 (no batch padding path)
    batch = 8
    x = jax.random.normal(kx, (batch, input_features), jnp.float32)
    out = jax.block_until_ready(binary_classifier_forward(x, *params))
    ref = _reference(x, params)
    assert out.shape == (batch, output_dim), out.shape
    assert jnp.allclose(out, ref, atol=2e-2), "mismatch vs reference (batch=8)"

    # Check 2: ragged batch (exercises batch padding + row slice)
    batch2 = 10
    x2 = jax.random.normal(kx2, (batch2, input_features), jnp.float32)
    out2 = jax.block_until_ready(binary_classifier_forward(x2, *params))
    ref2 = _reference(x2, params)
    assert out2.shape == (batch2, output_dim), out2.shape
    assert jnp.allclose(out2, ref2, atol=2e-2), "mismatch vs reference (batch=10)"

    print("KERNEL_OK")
</pallas_src>

<mosaic_0001>
module attributes {stable_mosaic.version = 11 : i64} {
  func.func @_mlp_kernel(%arg0: i32, %arg1: memref<8x32xbf16, #tpu.memory_space<vmem>>, %arg2: memref<32x32xbf16, #tpu.memory_space<vmem>>, %arg3: memref<1x32xf32, #tpu.memory_space<vmem>>, %arg4: memref<32x32xbf16, #tpu.memory_space<vmem>>, %arg5: memref<1x32xf32, #tpu.memory_space<vmem>>, %arg6: memref<32x1xbf16, #tpu.memory_space<vmem>>, %arg7: memref<1x1xf32, #tpu.memory_space<vmem>>, %arg8: memref<8x1xf32, #tpu.memory_space<vmem>>) attributes {dimension_semantics = [#tpu.dimension_semantics<parallel>], iteration_bounds = array<i64: 1>, scalar_prefetch = 0 : i64, scratch_operands = 0 : i64, tpu.core_type = #tpu.core_type<tc>, window_params = [{transform_indices = @transform_0, window_bounds = array<i64: 8, 32>}, {pipeline_mode = #tpu.pipeline_mode<synchronous>, transform_indices = @transform_1, window_bounds = array<i64: 32, 32>}, {pipeline_mode = #tpu.pipeline_mode<synchronous>, transform_indices = @transform_2, window_bounds = array<i64: 1, 32>}, {pipeline_mode = #tpu.pipeline_mode<synchronous>, transform_indices = @transform_3, window_bounds = array<i64: 32, 32>}, {pipeline_mode = #tpu.pipeline_mode<synchronous>, transform_indices = @transform_4, window_bounds = array<i64: 1, 32>}, {pipeline_mode = #tpu.pipeline_mode<synchronous>, transform_indices = @transform_5, window_bounds = array<i64: 32, 1>}, {pipeline_mode = #tpu.pipeline_mode<synchronous>, transform_indices = @transform_6, window_bounds = array<i64: 1, 1>}, {transform_indices = @transform_7, window_bounds = array<i64: 8, 1>}]} {
    %c0 = arith.constant 0 : index
    %c0_0 = arith.constant 0 : index
    %0 = vector.load %arg1[%c0, %c0_0] : memref<8x32xbf16, #tpu.memory_space<vmem>>, vector<8x32xbf16>
    %c0_1 = arith.constant 0 : index
    %c0_2 = arith.constant 0 : index
    %1 = vector.load %arg2[%c0_1, %c0_2] : memref<32x32xbf16, #tpu.memory_space<vmem>>, vector<32x32xbf16>
    %cst = arith.constant dense<0.000000e+00> : vector<8x32xf32>
    %2 = tpu.matmul %0, %1, %cst {dimension_numbers = #tpu.dot_dimension_numbers<[1], [0], [0], [1], [0, 0, 1, 1], [], []>} : vector<8x32xbf16>, vector<32x32xbf16>, vector<8x32xf32> -> vector<8x32xf32>
    %c0_3 = arith.constant 0 : index
    %c0_4 = arith.constant 0 : index
    %3 = vector.load %arg3[%c0_3, %c0_4] : memref<1x32xf32, #tpu.memory_space<vmem>>, vector<1x32xf32>
    %4 = vector.broadcast %3 : vector<1x32xf32> to vector<8x32xf32>
    %5 = arith.addf %2, %4 : vector<8x32xf32>
    %cst_5 = arith.constant 0.000000e+00 : f32
    %6 = vector.broadcast %cst_5 : f32 to vector<8x32xf32>
    %7 = arith.maximumf %5, %6 : vector<8x32xf32>
    %8 = arith.truncf %7 : vector<8x32xf32> to vector<8x32xbf16>
    %c0_6 = arith.constant 0 : index
    %c0_7 = arith.constant 0 : index
    %9 = vector.load %arg4[%c0_6, %c0_7] : memref<32x32xbf16, #tpu.memory_space<vmem>>, vector<32x32xbf16>
    %cst_8 = arith.constant dense<0.000000e+00> : vector<8x32xf32>
    %10 = tpu.matmul %8, %9, %cst_8 {dimension_numbers = #tpu.dot_dimension_numbers<[1], [0], [0], [1], [0, 0, 1, 1], [], []>} : vector<8x32xbf16>, vector<32x32xbf16>, vector<8x32xf32> -> vector<8x32xf32>
    %c0_9 = arith.constant 0 : index
    %c0_10 = arith.constant 0 : index
    %11 = vector.load %arg5[%c0_9, %c0_10] : memref<1x32xf32, #tpu.memory_space<vmem>>, vector<1x32xf32>
    %12 = vector.broadcast %11 : vector<1x32xf32> to vector<8x32xf32>
    %13 = arith.addf %10, %12 : vector<8x32xf32>
    %cst_11 = arith.constant 0.000000e+00 : f32
    %14 = vector.broadcast %cst_11 : f32 to vector<8x32xf32>
    %15 = arith.maximumf %13, %14 : vector<8x32xf32>
    %16 = arith.truncf %15 : vector<8x32xf32> to vector<8x32xbf16>
    %c0_12 = arith.constant 0 : index
    %c0_13 = arith.constant 0 : index
    %17 = vector.load %arg6[%c0_12, %c0_13] : memref<32x1xbf16, #tpu.memory_space<vmem>>, vector<32x1xbf16>
    %cst_14 = arith.constant dense<0.000000e+00> : vector<8x1xf32>
    %18 = tpu.matmul %16, %17, %cst_14 {dimension_numbers = #tpu.dot_dimension_numbers<[1], [0], [0], [1], [0, 0, 1, 1], [], []>} : vector<8x32xbf16>, vector<32x1xbf16>, vector<8x1xf32> -> vector<8x1xf32>
    %c0_15 = arith.constant 0 : index
    %c0_16 = arith.constant 0 : index
    %19 = vector.load %arg7[%c0_15, %c0_16] : memref<1x1xf32, #tpu.memory_space<vmem>>, vector<1x1xf32>
    %20 = vector.broadcast %19 : vector<1x1xf32> to vector<8x1xf32>
    %21 = arith.addf %18, %20 : vector<8x1xf32>
    %22 = arith.negf %21 : vector<8x1xf32>
    %23 = math.exp %22 : vector<8x1xf32>
    %cst_17 = arith.constant 1.000000e+00 : f32
    %24 = vector.broadcast %cst_17 : f32 to vector<8x1xf32>
    %25 = arith.addf %24, %23 : vector<8x1xf32>
    %26 = arith.divf %24, %25 : vector<8x1xf32>
    %c0_18 = arith.constant 0 : index
    %c0_19 = arith.constant 0 : index
    %27 = vector.load %arg8[%c0_18, %c0_19] : memref<8x1xf32, #tpu.memory_space<vmem>>, vector<8x1xf32>
    tpu.vector_store %arg8[%c0_18, %c0_19], %26 {strides = array<i32>} : memref<8x1xf32, #tpu.memory_space<vmem>>, vector<8x1xf32>,
    return
  }
  func.func @transform_0(%arg0: i32) -> (i32, i32) {
    %c0_i32 = arith.constant 0 : i32
    %c0_i32_0 = arith.constant 0 : i32
    return %arg0, %c0_i32 : i32, i32
  }
  func.func @transform_1(%arg0: i32) -> (i32, i32) {
    %c0_i32 = arith.constant 0 : i32
    %c0_i32_0 = arith.constant 0 : i32
    %c0_i32_1 = arith.constant 0 : i32
    return %c0_i32, %c0_i32_0 : i32, i32
  }
  func.func @transform_2(%arg0: i32) -> (i32, i32) {
    %c0_i32 = arith.constant 0 : i32
    %c0_i32_0 = arith.constant 0 : i32
    %c0_i32_1 = arith.constant 0 : i32
    return %c0_i32, %c0_i32_0 : i32, i32
  }
  func.func @transform_3(%arg0: i32) -> (i32, i32) {
    %c0_i32 = arith.constant 0 : i32
    %c0_i32_0 = arith.constant 0 : i32
    %c0_i32_1 = arith.constant 0 : i32
    return %c0_i32, %c0_i32_0 : i32, i32
  }
  func.func @transform_4(%arg0: i32) -> (i32, i32) {
    %c0_i32 = arith.constant 0 : i32
    %c0_i32_0 = arith.constant 0 : i32
    %c0_i32_1 = arith.constant 0 : i32
    return %c0_i32, %c0_i32_0 : i32, i32
  }
  func.func @transform_5(%arg0: i32) -> (i32, i32) {
    %c0_i32 = arith.constant 0 : i32
    %c0_i32_0 = arith.constant 0 : i32
    %c0_i32_1 = arith.constant 0 : i32
    return %c0_i32, %c0_i32_0 : i32, i32
  }
  func.func @transform_6(%arg0: i32) -> (i32, i32) {
    %c0_i32 = arith.constant 0 : i32
    %c0_i32_0 = arith.constant 0 : i32
    %c0_i32_1 = arith.constant 0 : i32
    return %c0_i32, %c0_i32_0 : i32, i32
  }
  func.func @transform_7(%arg0: i32) -> (i32, i32) {
    %c0_i32 = arith.constant 0 : i32
    %c0_i32_0 = arith.constant 0 : i32
    return %arg0, %c0_i32 : i32, i32
  }
}

</mosaic_0001>

<llo_original>
// kernel: tpu_custom_call.1
$region0: #{tpu_custom_call.1}
  #allocation0 [shape = 'u32[]', space=smem, size = 0x4, offset = 0x4, fixed_abs, tag = 'smem constant byte address 0x4 - core index']
  #allocation1 [shape = 'u32[144,128]{1,0:T(1,128)}', space=vmem, size = 0x12000, scoped, tag = 'internal scratch']
  #allocation2 [shape = 'f32[1,1]{1,0:T(1,128)S(1)}', space=vmem, size = 0x200, scoped, tag = 'scoped memory for tpu_custom_call.1']
  %s0 = inlined_call_operand.hbm [shape: bf16[8,32], index: 0, kind: input, shape index: {}]
  %s1 = inlined_call_operand.vmem [shape: bf16[32,32], index: 1, kind: input, shape index: {}]
  %s2 = inlined_call_operand.hbm [shape: f32[1,32], index: 2, kind: input, shape index: {}]
  %s3 = inlined_call_operand.vmem [shape: bf16[32,32], index: 3, kind: input, shape index: {}]
  %s4 = inlined_call_operand.vmem [shape: f32[1,32], index: 4, kind: input, shape index: {}]
  %s5 = inlined_call_operand.vmem [shape: bf16[32,1], index: 5, kind: input, shape index: {}]
  %s6 = inlined_call_operand.<no memory space> [shape: f32[1,1], index: 6, kind: input, shape index: {}]
  %s7 = inlined_call_operand.vmem [shape: f32[8,1], index: 7, kind: output, shape index: {}]
  %s8 = sld [smem:[#allocation0]]
  $region46: #{tpu_custom_call.1} parent=0
    _
  %s10 = ssub.s32 1, %s8
  %s11 = scalar_select 0, %s10, %s8
  %v12 = vstv %s6
  %13 = vst [vmem:[#allocation2] sm:$0x1] %v12
  $region1: #{tpu_custom_call.1} parent=0
    #allocation3 [shape = 'u8[2048]{0}', space=vmem, size = 0x800, scoped, tag = 'input window, operand 0, single buffered']
    #allocation4 [shape = 's32[1]{0}', space=sflag, size = 0x4, scoped, tag = 'scoped memory for tpu_custom_call.1']
    #allocation5 [shape = 'u8[512]{0}', space=vmem, size = 0x400, scoped, tag = 'input window, operand 2, single buffered']
    #allocation6 [shape = 's32[1]{0}', space=sflag, size = 0x4, scoped, tag = 'scoped memory for tpu_custom_call.1']
    %14 = vsyncpa [#allocation4], 0
    %15 = vsyncpa [#allocation6], 0
    // Predicated region
    $region2: #{tpu_custom_call.1} parent=1 // pred_check
      _
    $region3: #{tpu_custom_call.1} parent=1 // pred_check_branch
      %17 = sbr.rel (0) target = $region5
    $region4: #{tpu_custom_call.1} parent=1 // pred_region
      %s19 = ssub.s32 64, 64
      %20 = vsyncadd [#allocation4], %s19
      %s22 = sshll.u32 [#allocation3], 4
      %s23 = int_to_ptr.vmem [resolvable:$true] %s22
      %25 = dma.hbm_to_vmem [thread:$0]  %s0, 64, %s23, [#allocation4]
    $region5: #{tpu_custom_call.1} parent=1 // pred_fallthru
      _
    // Predicated region
    $region6: #{tpu_custom_call.1} parent=1 // pred_check
      _
    $region7: #{tpu_custom_call.1} parent=1 // pred_check_branch
      %27 = sbr.rel (0) target = $region9
    $region8: #{tpu_custom_call.1} parent=1 // pred_region
      _
    $region9: #{tpu_custom_call.1} parent=1 // pred_fallthru
      _
    // Predicated region
    $region10: #{tpu_custom_call.1} parent=1 // pred_check
      _
    $region11: #{tpu_custom_call.1} parent=1 // pred_check_branch
      %29 = sbr.rel (0) target = $region13
    $region12: #{tpu_custom_call.1} parent=1 // pred_region
      %s31 = ssub.s32 16, 16
      %32 = vsyncadd [#allocation6], %s31
      %s34 = sshll.u32 [#allocation5], 4
      %s35 = int_to_ptr.vmem [resolvable:$true] %s34
      %37 = dma.hbm_to_vmem [thread:$0]  %s2, 16, %s35, [#allocation6]
    $region13: #{tpu_custom_call.1} parent=1 // pred_fallthru
      _
    // Predicated region
    $region14: #{tpu_custom_call.1} parent=1 // pred_check
      _
    $region15: #{tpu_custom_call.1} parent=1 // pred_check_branch
      %39 = sbr.rel (0) target = $region17
    $region16: #{tpu_custom_call.1} parent=1 // pred_region
      _
    $region17: #{tpu_custom_call.1} parent=1 // pred_fallthru
      _
    // Predicated region
    $region18: #{tpu_custom_call.1} parent=1 // pred_check
      _
    $region19: #{tpu_custom_call.1} parent=1 // pred_check_branch
      %41 = sbr.rel (0) target = $region21
    $region20: #{tpu_custom_call.1} parent=1 // pred_region
      _
    $region21: #{tpu_custom_call.1} parent=1 // pred_fallthru
      _
    // Predicated region
    $region22: #{tpu_custom_call.1} parent=1 // pred_check
      _
    $region23: #{tpu_custom_call.1} parent=1 // pred_check_branch
      %43 = sbr.rel (0) target = $region25
    $region24: #{tpu_custom_call.1} parent=1 // pred_region
      _
    $region25: #{tpu_custom_call.1} parent=1 // pred_fallthru
      _
    // Predicated region
    $region26: #{tpu_custom_call.1} parent=1 // pred_check
      _
    $region27: #{tpu_custom_call.1} parent=1 // pred_check_branch
      %45 = sbr.rel (0) target = $region29
    $region28: #{tpu_custom_call.1} parent=1 // pred_region
      _
    $region29: #{tpu_custom_call.1} parent=1 // pred_fallthru
      _
    // Predicated region
    $region30: #{tpu_custom_call.1} parent=1 // pred_check
      _
    $region31: #{tpu_custom_call.1} parent=1 // pred_check_branch
      %47 = sbr.rel (0) target = $region33
    $region32: #{tpu_custom_call.1} parent=1 // pred_region
      %48 = dma.done [#allocation4], 64
    $region33: #{tpu_custom_call.1} parent=1 // pred_fallthru
      _
    // Predicated region
    $region34: #{tpu_custom_call.1} parent=1 // pred_check
      _
    $region35: #{tpu_custom_call.1} parent=1 // pred_check_branch
      %50 = sbr.rel (0) target = $region37
    $region36: #{tpu_custom_call.1} parent=1 // pred_region
      %51 = dma.done [#allocation6], 16
    $region37: #{tpu_custom_call.1} parent=1 // pred_fallthru
      _
    %v53 = vld [vmem:[#allocation3] sm:$0xf]
    %v54 = vld [vmem:[%s1] sm:$0xf]
    %v55 = vld [vmem:[%s1 + $0x4] sm:$0xf]
    %v56 = vld [vmem:[%s1 + $0x8] sm:$0xf]
    %v57 = vld [vmem:[%s1 + $0xc] sm:$0xf]
    %v58 = vld [vmem:[#allocation5] sm:$0x1]
    %v60 = vlaneseq
    %v61 = vshrl.u32 %v60, 7
    %v62 = vsub.s32 0, %v61
    %v63 = vrot.slane %v58, %v62
    %v69 = vunpack.c.l.b16 %v54
    %v70 = vunpack.c.l.b16 %v55
    %v71 = vunpack.c.l.b16 %v56
    %v72 = vunpack.c.l.b16 %v57
    %v73 = vpack.c.b16 %v70, %v69
    %v74 = vpack.c.b16 %v72, %v71
    %vm77 = vcmask 261120
    %v79 = vsel %vm77, %v53, 0
    %81 = vmatprep.subr.bf16.mxu0 0
    %82 = vmatpush1.bf16.msra.mxu0 %v73
    %83 = vmatprep.subr.bf16.mxu0 0
    %84 = vmatpush1.bf16.msra.mxu0 %v74
    %85 = vmatprep.subr.bf16.mxu0 0
    %86 = vmatpush1.bf16.msra.mxu0 0
    %87 = vmatprep.subr.bf16.mxu0 0
    %88 = vmatpush1.bf16.msra.mxu0 0
    %89 = vmatprep.subr.bf16.mxu0 0
    %90 = vmatpush1.bf16.msra.mxu0 0
    %91 = vmatprep.subr.bf16.mxu0 0
    %92 = vmatpush1.bf16.msra.mxu0 0
    %93 = vmatprep.subr.bf16.mxu0 0
    %94 = vmatpush1.bf16.msra.mxu0 0
    %95 = vmatprep.subr.bf16.mxu0 0
    %96 = vmatpush1.bf16.msra.mxu0 0
    %97 = vmatprep.subr.bf16.mxu0 0
    %98 = vmatpush1.bf16.msra.mxu0 0
    %99 = vmatprep.subr.bf16.mxu0 0
    %100 = vmatpush1.bf16.msra.mxu0 0
    %101 = vmatprep.subr.bf16.mxu0 0
    %102 = vmatpush1.bf16.msra.mxu0 0
    %103 = vmatprep.subr.bf16.mxu0 0
    %104 = vmatpush1.bf16.msra.mxu0 0
    %105 = vmatprep.subr.bf16.mxu0 0
    %106 = vmatpush1.bf16.msra.mxu0 0
    %107 = vmatprep.subr.bf16.mxu0 0
    %108 = vmatpush1.bf16.msra.mxu0 0
    %109 = vmatprep.subr.bf16.mxu0 0
    %110 = vmatpush1.bf16.msra.mxu0 0
    %111 = vmatprep.subr.bf16.mxu0 0
    %112 = vmatpush1.bf16.msra.mxu0 0
    %113 = vmatprep.mubr.bf16.mxu0 0
    %114 = vmatmul.mubr.bf16.gmra.mrb[0].mxu0 %v79
    %v115 = vpop.f32.mrb[0].mxu0
    %v116 = vadd.f32 %v63, %v115
    %v117 = vpop.f32.mrb[0].mxu0
    %v118 = vpop.f32.mrb[0].mxu0
    %v119 = vpop.f32.mrb[0].mxu0
    %120 = vdwg.mxu0
    %v121 = vmax.f32 %v116, 0.0
    %v122 = vpack.c.bf16 %v121, %v121
    %v123 = vld [vmem:[%s3] sm:$0xf]
    %v124 = vld [vmem:[%s3 + $0x4] sm:$0xf]
    %v125 = vld [vmem:[%s3 + $0x8] sm:$0xf]
    %v126 = vld [vmem:[%s3 + $0xc] sm:$0xf]
    %v127 = vld [vmem:[%s4] sm:$0x1]
    %v129 = vlaneseq
    %v130 = vshrl.u32 %v129, 7
    %v131 = vsub.s32 0, %v130
    %v132 = vrot.slane %v127, %v131
    %v138 = vunpack.c.l.b16 %v123
    %v139 = vunpack.c.l.b16 %v124
    %v140 = vunpack.c.l.b16 %v125
    %v141 = vunpack.c.l.b16 %v126
    %v142 = vpack.c.b16 %v139, %v138
    %v143 = vpack.c.b16 %v141, %v140
    %v147 = vsel %vm77, %v122, 0
    %149 = vmatprep.subr.bf16.mxu0 0
    %150 = vmatpush1.bf16.msra.mxu0 %v142
    %151 = vmatprep.subr.bf16.mxu0 0
    %152 = vmatpush1.bf16.msra.mxu0 %v143
    %153 = vmatprep.subr.bf16.mxu0 0
    %154 = vmatpush1.bf16.msra.mxu0 0
    %155 = vmatprep.subr.bf16.mxu0 0
    %156 = vmatpush1.bf16.msra.mxu0 0
    %157 = vmatprep.subr.bf16.mxu0 0
    %158 = vmatpush1.bf16.msra.mxu0 0
    %159 = vmatprep.subr.bf16.mxu0 0
    %160 = vmatpush1.bf16.msra.mxu0 0
    %161 = vmatprep.subr.bf16.mxu0 0
    %162 = vmatpush1.bf16.msra.mxu0 0
    %163 = vmatprep.subr.bf16.mxu0 0
    %164 = vmatpush1.bf16.msra.mxu0 0
    %165 = vmatprep.subr.bf16.mxu0 0
    %166 = vmatpush1.bf16.msra.mxu0 0
    %167 = vmatprep.subr.bf16.mxu0 0
    %168 = vmatpush1.bf16.msra.mxu0 0
    %169 = vmatprep.subr.bf16.mxu0 0
    %170 = vmatpush1.bf16.msra.mxu0 0
    %171 = vmatprep.subr.bf16.mxu0 0
    %172 = vmatpush1.bf16.msra.mxu0 0
    %173 = vmatprep.subr.bf16.mxu0 0
    %174 = vmatpush1.bf16.msra.mxu0 0
    %175 = vmatprep.subr.bf16.mxu0 0
    %176 = vmatpush1.bf16.msra.mxu0 0
    %177 = vmatprep.subr.bf16.mxu0 0
    %178 = vmatpush1.bf16.msra.mxu0 0
    %179 = vmatprep.subr.bf16.mxu0 0
    %180 = vmatpush1.bf16.msra.mxu0 0
    %181 = vmatprep.mubr.bf16.mxu0 0
    %182 = vmatmul.mubr.bf16.gmra.mrb[0].mxu0 %v147
    %v183 = vpop.f32.mrb[0].mxu0
    %v184 = vadd.f32 %v132, %v183
    %v185 = vpop.f32.mrb[0].mxu0
    %v186 = vpop.f32.mrb[0].mxu0
    %v187 = vpop.f32.mrb[0].mxu0
    %188 = vdwg.mxu0
    %v189 = vmax.f32 %v184, 0.0
    %v190 = vpack.c.bf16 %v189, %v189
    %v191 = vld [vmem:[%s5] sm:$0xf]
    %v192 = vld [vmem:[%s5 + $0x4] sm:$0xf]
    %v193 = vld [vmem:[%s5 + $0x8] sm:$0xf]
    %v194 = vld [vmem:[%s5 + $0xc] sm:$0xf]
    %v195 = vld [vmem:[#allocation2] sm:$0x1]
    %v197 = vlaneseq
    %v198 = vshrl.u32 %v197, 7
    %v199 = vsub.s32 0, %v198
    %v200 = vrot.slane %v195, %v199
    %v206 = vunpack.c.l.b16 %v191
    %v207 = vunpack.c.l.b16 %v192
    %v208 = vunpack.c.l.b16 %v193
    %v209 = vunpack.c.l.b16 %v194
    %v210 = vpack.c.b16 %v207, %v206
    %v211 = vpack.c.b16 %v209, %v208
    %v215 = vsel %vm77, %v190, 0
    %217 = vmatprep.subr.bf16.mxu0 0
    %218 = vmatpush1.bf16.msra.mxu0 %v210
    %219 = vmatprep.subr.bf16.mxu0 0
    %220 = vmatpush1.bf16.msra.mxu0 %v211
    %221 = vmatprep.subr.bf16.mxu0 0
    %222 = vmatpush1.bf16.msra.mxu0 0
    %223 = vmatprep.subr.bf16.mxu0 0
    %224 = vmatpush1.bf16.msra.mxu0 0
    %225 = vmatprep.subr.bf16.mxu0 0
    %226 = vmatpush1.bf16.msra.mxu0 0
    %227 = vmatprep.subr.bf16.mxu0 0
    %228 = vmatpush1.bf16.msra.mxu0 0
    %229 = vmatprep.subr.bf16.mxu0 0
    %230 = vmatpush1.bf16.msra.mxu0 0
    %231 = vmatprep.subr.bf16.mxu0 0
    %232 = vmatpush1.bf16.msra.mxu0 0
    %233 = vmatprep.subr.bf16.mxu0 0
    %234 = vmatpush1.bf16.msra.mxu0 0
    %235 = vmatprep.subr.bf16.mxu0 0
    %236 = vmatpush1.bf16.msra.mxu0 0
    %237 = vmatprep.subr.bf16.mxu0 0
    %238 = vmatpush1.bf16.msra.mxu0 0
    %239 = vmatprep.subr.bf16.mxu0 0
    %240 = vmatpush1.bf16.msra.mxu0 0
    %241 = vmatprep.subr.bf16.mxu0 0
    %242 = vmatpush1.bf16.msra.mxu0 0
    %243 = vmatprep.subr.bf16.mxu0 0
    %244 = vmatpush1.bf16.msra.mxu0 0
    %245 = vmatprep.subr.bf16.mxu0 0
    %246 = vmatpush1.bf16.msra.mxu0 0
    %247 = vmatprep.subr.bf16.mxu0 0
    %248 = vmatpush1.bf16.msra.mxu0 0
    %249 = vmatprep.mubr.bf16.mxu0 0
    %250 = vmatmul.mubr.bf16.gmra.mrb[0].mxu0 %v215
    %v251 = vpop.f32.mrb[0].mxu0
    %v252 = vadd.f32 %v200, %v251
    %v253 = vpop.f32.mrb[0].mxu0
    %v254 = vpop.f32.mrb[0].mxu0
    %v255 = vpop.f32.mrb[0].mxu0
    %256 = vdwg.mxu0
    %v257 = vxor.u32 %v252, 2147483648
    %v258 = vmul.f32 %v257, 1.442695
    %v259 = vpow.pop %v258
    %v260 = vadd.f32 %v259, 1.0
    %v261 = vrcp.pop %v260
    %v262 = vmul.f32 1.0, %v261
    %vm263 = vcmask 7168
    %264 = vst.msk [vmem:[%s7] sm:$0xff] %vm263, %v262
    // Predicated region
    $region38: #{tpu_custom_call.1} parent=1 // pred_check
      _
    $region39: #{tpu_custom_call.1} parent=1 // pred_check_branch
      %266 = sbr.rel (0) target = $region41
    $region40: #{tpu_custom_call.1} parent=1 // pred_region
      _
    $region41: #{tpu_custom_call.1} parent=1 // pred_fallthru
      _
    // Predicated region
    $region42: #{tpu_custom_call.1} parent=1 // pred_check
      _
    $region43: #{tpu_custom_call.1} parent=1 // pred_check_branch
      %268 = sbr.rel (0) target = $region45
    $region44: #{tpu_custom_call.1} parent=1 // pred_region
      _
    $region45: #{tpu_custom_call.1} parent=1 // pred_fallthru
      _
    %269 = vsyncpa [#allocation4], 1
    %270 = vsyncpa [#allocation6], 1

</llo_original>
